<compile_context>
chip_gen: v7x
topology: tpu7x:2x2x1
jax: 0.10.0
libtpu: 0.0.40
codegen_flags: <defaults>
</compile_context>

<pallas_src>
import jax
import jax.numpy as jnp
from jax.experimental import pallas as pl
from jax.experimental.pallas import tpu as pltpu


def cnn_kernel(x_ref, wcol_ref, bconv_ref, wlin_ref, blin_ref, out_ref):
    # x_ref:     (BT, L, D)        unpadded input tile (channels-last)
    # wcol_ref:  (K*D, C_pad)      conv weight, taps flattened into contraction
    # bconv_ref: (1, C_pad)        conv bias (zero-padded)
    # wlin_ref:  (C_pad, O_pad)    linear weight (zero-padded)
    # blin_ref:  (1, O_pad)        linear bias (zero-padded)
    # out_ref:   (BT, O_pad)
    bt, l, d = x_ref.shape
    kd, c_pad = wcol_ref.shape
    k_size = kd // d                      # static python ints at trace time
    pad = (k_size - 1) // 2

    x = x_ref[...].astype(jnp.bfloat16)   # (BT, L, D), bf16 for the MXU

    # im2col built once: xcol[b, l, k*D:(k+1)*D] = x[b, l + k - pad, :]
    # ('same' padding realised as zero edges per batch row; no HBM-side pad).
    pieces = []
    for k in range(k_size):               # static, small trip count
        sh = k - pad
        if sh == 0:
            pieces.append(x)
        elif sh > 0:
            zeros = jnp.zeros((bt, sh, d), jnp.bfloat16)
            pieces.append(jnp.concatenate([x[:, sh:, :], zeros], axis=1))
        else:
            zeros = jnp.zeros((bt, -sh, d), jnp.bfloat16)
            pieces.append(jnp.concatenate([zeros, x[:, :l + sh, :]], axis=1))
    xcol = jnp.concatenate(pieces, axis=2).reshape(bt * l, kd)   # (BT*L, K*D)

    # Conv1d over all taps as ONE matmul: M = BT*L, contraction K*D, N = C_pad.
    conv = jnp.dot(xcol, wcol_ref[...], preferred_element_type=jnp.float32)
    conv = jnp.maximum(conv + bconv_ref[...], 0.0)               # bias + ReLU

    # MaxPool2d(kernel_size=(1, review_length)) -> max over the length axis.
    # (L is a multiple of 8 in the demo, so this reshape is layout-preserving.)
    hidden = jnp.max(conv.reshape(bt, l, c_pad), axis=1)         # (BT, C_pad)

    # Dropout (eval) is identity.

    # Linear + ReLU (lane-dense (BT, O_pad) store).
    y = jnp.dot(hidden.astype(jnp.bfloat16), wlin_ref[...],
                preferred_element_type=jnp.float32)
    out_ref[...] = jnp.maximum(y + blin_ref[...], 0.0).astype(out_ref.dtype)


def deepconn_cnn(vec, w_conv, b_conv, w_lin, b_lin, *, kernel_size,
                 batch_tile=None):
    """vec: (B, L, D) float32.  w_conv: (K, D, C).  Returns (B, cnn_out_dim) f32."""
    B, L, D = vec.shape
    K, Dw, C = w_conv.shape
    assert K == kernel_size and Dw == D
    # Even kernel_size with padding=(k-1)//2 changes the output length in the
    # PyTorch module; only odd ('same') kernels are supported here.
    assert kernel_size % 2 == 1, "kernel_size must be odd (same-padding conv)"
    O = w_lin.shape[1]

    LANE = 128
    C_pad = max(LANE, -(-C // LANE) * LANE)
    O_pad = max(LANE, -(-O // LANE) * LANE)

    # Conv weight: (K, D, C) -> zero-pad channels -> (K*D, C_pad), bf16.
    wcol = jnp.zeros((K, D, C_pad), jnp.float32).at[:, :, :C].set(w_conv)
    wcol = wcol.reshape(K * D, C_pad).astype(jnp.bfloat16)
    bconv = jnp.zeros((1, C_pad), jnp.float32).at[:, :C].set(b_conv.reshape(1, C))
    wlin = jnp.zeros((C_pad, O_pad), jnp.float32).at[:C, :O].set(w_lin)
    wlin = wlin.astype(jnp.bfloat16)
    blin = jnp.zeros((1, O_pad), jnp.float32).at[:, :O].set(b_lin.reshape(1, O))

    if batch_tile is None:
        # This problem is launch/step-overhead bound: do it in one grid step.
        # For production B (thousands), pick batch_tile so batch_tile*L is a
        # multiple of 256 and 2x the input tile fits VMEM (v7x: 64 MiB phys,
        # 32 MiB default scoped), and keep >=2 steps so v7x's 2 TCs share work.
        batch_tile = B
    assert B % batch_tile == 0
    grid = (B // batch_tile,)

    out = pl.pallas_call(
        cnn_kernel,
        out_shape=jax.ShapeDtypeStruct((B, O_pad), jnp.float32),
        grid_spec=pltpu.PrefetchScalarGridSpec(
            num_scalar_prefetch=0,
            grid=grid,
            in_specs=[
                pl.BlockSpec((batch_tile, L, D), lambda i: (i, 0, 0)),
                pl.BlockSpec((K * D, C_pad), lambda i: (0, 0)),
                pl.BlockSpec((1, C_pad), lambda i: (0, 0)),
                pl.BlockSpec((C_pad, O_pad), lambda i: (0, 0)),
                pl.BlockSpec((1, O_pad), lambda i: (0, 0)),
            ],
            out_specs=pl.BlockSpec((batch_tile, O_pad), lambda i: (i, 0)),
        ),
        compiler_params=pltpu.CompilerParams(
            dimension_semantics=("parallel",)),
    )(vec, wcol, bconv, wlin, blin)

    return out[:, :O]


def reference(vec, w_conv, b_conv, w_lin, b_lin, kernel_size):
    """Pure-JAX f32 reference matching the PyTorch forward (eval mode)."""
    B, L, D = vec.shape
    K, _, C = w_conv.shape
    pad = (kernel_size - 1) // 2
    x_pad = jnp.pad(vec, ((0, 0), (pad, pad), (0, 0)))
    conv = jnp.zeros((B, L, C), jnp.float32)
    for k in range(K):
        conv = conv + jnp.einsum("bld,dc->blc", x_pad[:, k:k + L, :], w_conv[k])
    conv = jnp.maximum(conv + b_conv.reshape(1, 1, C), 0.0)
    hidden = jnp.max(conv, axis=1)                       # maxpool over length
    y = jnp.maximum(hidden @ w_lin + b_lin.reshape(1, -1), 0.0)
    return y


if __name__ == "__main__":
    # Synthetic config (small shapes):
    #   word_dim=32, kernel_count=16, kernel_size=3, review_length=16,
    #   cnn_out_dim=32, batch (= batch_size * review_count) = 16.
    B, L, D = 16, 16, 32
    kernel_count, kernel_size, cnn_out_dim = 16, 3, 32

    key = jax.random.PRNGKey(0)
    k_x, k_wc, k_bc, k_wl, k_bl = jax.random.split(key, 5)
    vec = jax.random.normal(k_x, (B, L, D), jnp.float32)
    w_conv = jax.random.normal(k_wc, (kernel_size, D, kernel_count), jnp.float32) * 0.1
    b_conv = jax.random.normal(k_bc, (kernel_count,), jnp.float32) * 0.1
    w_lin = jax.random.normal(k_wl, (kernel_count, cnn_out_dim), jnp.float32) * 0.1
    b_lin = jax.random.normal(k_bl, (cnn_out_dim,), jnp.float32) * 0.1

    out = deepconn_cnn(vec, w_conv, b_conv, w_lin, b_lin, kernel_size=kernel_size)
    out = jax.block_until_ready(out)

    ref = reference(vec, w_conv, b_conv, w_lin, b_lin, kernel_size)
    assert out.shape == (B, cnn_out_dim)
    # bf16 MXU operands (f32 accumulation) -> allow small numerical slack
    # vs the pure-f32 reference; structural bugs would blow way past this.
    assert jnp.allclose(out, ref, atol=5e-2, rtol=5e-2), "mismatch vs reference"

    print("KERNEL_OK")
</pallas_src>

<mosaic_0001>
module attributes {stable_mosaic.version = 11 : i64} {
  func.func @cnn_kernel(%arg0: i32, %arg1: memref<16x16x32xf32, #tpu.memory_space<vmem>>, %arg2: memref<96x128xbf16, #tpu.memory_space<vmem>>, %arg3: memref<1x128xf32, #tpu.memory_space<vmem>>, %arg4: memref<128x128xbf16, #tpu.memory_space<vmem>>, %arg5: memref<1x128xf32, #tpu.memory_space<vmem>>, %arg6: memref<16x128xf32, #tpu.memory_space<vmem>>) attributes {dimension_semantics = [#tpu.dimension_semantics<parallel>], iteration_bounds = array<i64: 1>, scalar_prefetch = 0 : i64, scratch_operands = 0 : i64, tpu.core_type = #tpu.core_type<tc>, window_params = [{transform_indices = @transform_0, window_bounds = array<i64: 16, 16, 32>}, {pipeline_mode = #tpu.pipeline_mode<synchronous>, transform_indices = @transform_1, window_bounds = array<i64: 96, 128>}, {pipeline_mode = #tpu.pipeline_mode<synchronous>, transform_indices = @transform_2, window_bounds = array<i64: 1, 128>}, {pipeline_mode = #tpu.pipeline_mode<synchronous>, transform_indices = @transform_3, window_bounds = array<i64: 128, 128>}, {pipeline_mode = #tpu.pipeline_mode<synchronous>, transform_indices = @transform_4, window_bounds = array<i64: 1, 128>}, {transform_indices = @transform_5, window_bounds = array<i64: 16, 128>}]} {
    %c0 = arith.constant 0 : index
    %c0_0 = arith.constant 0 : index
    %c0_1 = arith.constant 0 : index
    %0 = vector.load %arg1[%c0, %c0_0, %c0_1] : memref<16x16x32xf32, #tpu.memory_space<vmem>>, vector<16x16x32xf32>
    %1 = arith.truncf %0 : vector<16x16x32xf32> to vector<16x16x32xbf16>
    %cst = arith.constant 0.000000e+00 : bf16
    %2 = vector.broadcast %cst : bf16 to vector<16x1x32xbf16>
    %3 = vector.extract_strided_slice %1 {offsets = [0, 0, 0], sizes = [16, 15, 32], strides = [1, 1, 1]} : vector<16x16x32xbf16> to vector<16x15x32xbf16>
    %4 = tpu.concatenate %2, %3 in 1 : vector<16x1x32xbf16>, vector<16x15x32xbf16> -> vector<16x16x32xbf16>
    %cst_2 = arith.constant 0.000000e+00 : bf16
    %5 = vector.broadcast %cst_2 : bf16 to vector<16x1x32xbf16>
    %6 = vector.extract_strided_slice %1 {offsets = [0, 1, 0], sizes = [16, 15, 32], strides = [1, 1, 1]} : vector<16x16x32xbf16> to vector<16x15x32xbf16>
    %7 = tpu.concatenate %6, %5 in 1 : vector<16x15x32xbf16>, vector<16x1x32xbf16> -> vector<16x16x32xbf16>
    %8 = tpu.concatenate %4, %1, %7 in 2 : vector<16x16x32xbf16>, vector<16x16x32xbf16>, vector<16x16x32xbf16> -> vector<16x16x96xbf16>
    %9 = vector.shape_cast %8 : vector<16x16x96xbf16> to vector<256x96xbf16>
    %c0_3 = arith.constant 0 : index
    %c0_4 = arith.constant 0 : index
    %10 = vector.load %arg2[%c0_3, %c0_4] : memref<96x128xbf16, #tpu.memory_space<vmem>>, vector<96x128xbf16>
    %cst_5 = arith.constant dense<0.000000e+00> : vector<256x128xf32>
    %11 = tpu.matmul %9, %10, %cst_5 {dimension_numbers = #tpu.dot_dimension_numbers<[1], [0], [0], [1], [0, 0, 1, 1], [], []>} : vector<256x96xbf16>, vector<96x128xbf16>, vector<256x128xf32> -> vector<256x128xf32>
    %c0_6 = arith.constant 0 : index
    %c0_7 = arith.constant 0 : index
    %12 = vector.load %arg3[%c0_6, %c0_7] : memref<1x128xf32, #tpu.memory_space<vmem>>, vector<1x128xf32>
    %13 = vector.broadcast %12 : vector<1x128xf32> to vector<256x128xf32>
    %14 = arith.addf %11, %13 : vector<256x128xf32>
    %cst_8 = arith.constant 0.000000e+00 : f32
    %15 = vector.broadcast %cst_8 : f32 to vector<256x128xf32>
    %16 = arith.maximumf %14, %15 : vector<256x128xf32>
    %17 = vector.shape_cast %16 : vector<256x128xf32> to vector<16x16x128xf32>
    %cst_9 = arith.constant dense<0xFF800000> : vector<16x128xf32>
    %18 = vector.multi_reduction <maximumf>, %17, %cst_9 [1] : vector<16x16x128xf32> to vector<16x128xf32>
    %19 = arith.truncf %18 : vector<16x128xf32> to vector<16x128xbf16>
    %c0_10 = arith.constant 0 : index
    %c0_11 = arith.constant 0 : index
    %20 = vector.load %arg4[%c0_10, %c0_11] : memref<128x128xbf16, #tpu.memory_space<vmem>>, vector<128x128xbf16>
    %cst_12 = arith.constant dense<0.000000e+00> : vector<16x128xf32>
    %21 = tpu.matmul %19, %20, %cst_12 {dimension_numbers = #tpu.dot_dimension_numbers<[1], [0], [0], [1], [0, 0, 1, 1], [], []>} : vector<16x128xbf16>, vector<128x128xbf16>, vector<16x128xf32> -> vector<16x128xf32>
    %c0_13 = arith.constant 0 : index
    %c0_14 = arith.constant 0 : index
    %22 = vector.load %arg5[%c0_13, %c0_14] : memref<1x128xf32, #tpu.memory_space<vmem>>, vector<1x128xf32>
    %23 = vector.broadcast %22 : vector<1x128xf32> to vector<16x128xf32>
    %24 = arith.addf %21, %23 : vector<16x128xf32>
    %cst_15 = arith.constant 0.000000e+00 : f32
    %25 = vector.broadcast %cst_15 : f32 to vector<16x128xf32>
    %26 = arith.maximumf %24, %25 : vector<16x128xf32>
    %c0_16 = arith.constant 0 : index
    %c0_17 = arith.constant 0 : index
    %27 = vector.load %arg6[%c0_16, %c0_17] : memref<16x128xf32, #tpu.memory_space<vmem>>, vector<16x128xf32>
    tpu.vector_store %arg6[%c0_16, %c0_17], %26 {strides = array<i32>} : memref<16x128xf32, #tpu.memory_space<vmem>>, vector<16x128xf32>,
    return
  }
  func.func @transform_0(%arg0: i32) -> (i32, i32, i32) {
    %c0_i32 = arith.constant 0 : i32
    %c0_i32_0 = arith.constant 0 : i32
    %c0_i32_1 = arith.constant 0 : i32
    return %arg0, %c0_i32, %c0_i32_0 : i32, i32, i32
  }
  func.func @transform_1(%arg0: i32) -> (i32, i32) {
    %c0_i32 = arith.constant 0 : i32
    %c0_i32_0 = arith.constant 0 : i32
    %c0_i32_1 = arith.constant 0 : i32
    return %c0_i32, %c0_i32_0 : i32, i32
  }
  func.func @transform_2(%arg0: i32) -> (i32, i32) {
    %c0_i32 = arith.constant 0 : i32
    %c0_i32_0 = arith.constant 0 : i32
    %c0_i32_1 = arith.constant 0 : i32
    return %c0_i32, %c0_i32_0 : i32, i32
  }
  func.func @transform_3(%arg0: i32) -> (i32, i32) {
    %c0_i32 = arith.constant 0 : i32
    %c0_i32_0 = arith.constant 0 : i32
    %c0_i32_1 = arith.constant 0 : i32
    return %c0_i32, %c0_i32_0 : i32, i32
  }
  func.func @transform_4(%arg0: i32) -> (i32, i32) {
    %c0_i32 = arith.constant 0 : i32
    %c0_i32_0 = arith.constant 0 : i32
    %c0_i32_1 = arith.constant 0 : i32
    return %c0_i32, %c0_i32_0 : i32, i32
  }
  func.func @transform_5(%arg0: i32) -> (i32, i32) {
    %c0_i32 = arith.constant 0 : i32
    %c0_i32_0 = arith.constant 0 : i32
    return %arg0, %c0_i32 : i32, i32
  }
}

</mosaic_0001>

<llo_original>
// kernel: tpu_custom_call.1
$region0: #{tpu_custom_call.1}
  #allocation0 [shape = 'u32[]', space=smem, size = 0x4, offset = 0x4, fixed_abs, tag = 'smem constant byte address 0x4 - core index']
  #allocation1 [shape = 'u32[144,128]{1,0:T(1,128)}', space=vmem, size = 0x12000, scoped, tag = 'internal scratch']
  %s0 = inlined_call_operand.hbm [shape: f32[16,16,32], index: 0, kind: input, shape index: {}]
  %s1 = inlined_call_operand.hbm [shape: bf16[96,128], index: 1, kind: input, shape index: {}]
  %s2 = inlined_call_operand.vmem [shape: f32[1,128], index: 2, kind: input, shape index: {}]
  %s3 = inlined_call_operand.hbm [shape: bf16[128,128], index: 3, kind: input, shape index: {}]
  %s4 = inlined_call_operand.vmem [shape: f32[1,128], index: 4, kind: input, shape index: {}]
  %s5 = inlined_call_operand.hbm [shape: f32[16,128], index: 5, kind: output, shape index: {}]
  %s6 = sld [smem:[#allocation0]]
  $region42: #{tpu_custom_call.1} parent=0
    _
  %s8 = ssub.s32 1, %s6
  %s9 = scalar_select 0, %s8, %s6
  $region1: #{tpu_custom_call.1} parent=0
    #allocation2 [shape = 'u8[131072]{0}', space=vmem, size = 0x20000, scoped, tag = 'input window, operand 0, single buffered']
    #allocation3 [shape = 's32[1]{0}', space=sflag, size = 0x4, scoped, tag = 'scoped memory for tpu_custom_call.1']
    #allocation4 [shape = 's32[1]{0}', space=sflag, size = 0x4, scoped, tag = 'scoped memory for tpu_custom_call.1']
    #allocation5 [shape = 'u8[24576]{0}', space=vmem, size = 0x6000, scoped, tag = 'input window, operand 1, single buffered']
    #allocation6 [shape = 's32[1]{0}', space=sflag, size = 0x4, scoped, tag = 'scoped memory for tpu_custom_call.1']
    #allocation7 [shape = 'u8[32768]{0}', space=vmem, size = 0x8000, scoped, tag = 'input window, operand 3, single buffered']
    #allocation8 [shape = 'u8[8192]{0}', space=vmem, size = 0x2000, scoped, tag = 'output window, operand 0, single buffered']
    %10 = vsyncpa [#allocation3], 0
    %11 = vsyncpa [#allocation6], 0
    %12 = vsyncpa [#allocation4], 0
    // Predicated region
    $region2: #{tpu_custom_call.1} parent=1 // pred_check
      _
    $region3: #{tpu_custom_call.1} parent=1 // pred_check_branch
      %14 = sbr.rel (0) target = $region5
    $region4: #{tpu_custom_call.1} parent=1 // pred_region
      %s16 = ssub.s32 4096, 4096
      %17 = vsyncadd [#allocation3], %s16
      %s18 = sshll.u32 [#allocation2], 4
      %s19 = int_to_ptr.vmem [resolvable:$true] %s18
      %24 = dma.hbm_to_vmem [thread:$0]  %s0, 4096, %s19, [#allocation3], 128, 128, 8
    $region5: #{tpu_custom_call.1} parent=1 // pred_fallthru
      _
    // Predicated region
    $region6: #{tpu_custom_call.1} parent=1 // pred_check
      _
    $region7: #{tpu_custom_call.1} parent=1 // pred_check_branch
      %26 = sbr.rel (0) target = $region9
    $region8: #{tpu_custom_call.1} parent=1 // pred_region
      %s28 = ssub.s32 768, 768
      %29 = vsyncadd [#allocation6], %s28
      %s30 = sshll.u32 [#allocation5], 4
      %s31 = int_to_ptr.vmem [resolvable:$true] %s30
      %36 = dma.hbm_to_vmem [thread:$0]  %s1, 768, %s31, [#allocation6], 64, 64, 4
    $region9: #{tpu_custom_call.1} parent=1 // pred_fallthru
      _
    // Predicated region
    $region10: #{tpu_custom_call.1} parent=1 // pred_check
      _
    $region11: #{tpu_custom_call.1} parent=1 // pred_check_branch
      %38 = sbr.rel (0) target = $region13
    $region12: #{tpu_custom_call.1} parent=1 // pred_region
      _
    $region13: #{tpu_custom_call.1} parent=1 // pred_fallthru
      _
    // Predicated region
    $region14: #{tpu_custom_call.1} parent=1 // pred_check
      _
    $region15: #{tpu_custom_call.1} parent=1 // pred_check_branch
      %40 = sbr.rel (0) target = $region17
    $region16: #{tpu_custom_call.1} parent=1 // pred_region
      %s42 = ssub.s32 1024, 1024
      %43 = vsyncadd [#allocation6], %s42
      %s44 = sshll.u32 [#allocation7], 4
      %s45 = int_to_ptr.vmem [resolvable:$true] %s44
      %50 = dma.hbm_to_vmem [thread:$0]  %s3, 1024, %s45, [#allocation6], 64, 64, 4
    $region17: #{tpu_custom_call.1} parent=1 // pred_fallthru
      _
    // Predicated region
    $region18: #{tpu_custom_call.1} parent=1 // pred_check
      _
    $region19: #{tpu_custom_call.1} parent=1 // pred_check_branch
      %52 = sbr.rel (0) target = $region21
    $region20: #{tpu_custom_call.1} parent=1 // pred_region
      _
    $region21: #{tpu_custom_call.1} parent=1 // pred_fallthru
      _
    // Predicated region
    $region22: #{tpu_custom_call.1} parent=1 // pred_check
      _
    $region23: #{tpu_custom_call.1} parent=1 // pred_check_branch
      %54 = sbr.rel (0) target = $region25
    $region24: #{tpu_custom_call.1} parent=1 // pred_region
      %55 = dma.done [#allocation3], 4096
    $region25: #{tpu_custom_call.1} parent=1 // pred_fallthru
      _
    // Predicated region
    $region26: #{tpu_custom_call.1} parent=1 // pred_check
      _
    $region27: #{tpu_custom_call.1} parent=1 // pred_check_branch
      %57 = sbr.rel (0) target = $region29
    $region28: #{tpu_custom_call.1} parent=1 // pred_region
      %58 = dma.done [#allocation6], 768
    $region29: #{tpu_custom_call.1} parent=1 // pred_fallthru
      _
    // Predicated region
    $region30: #{tpu_custom_call.1} parent=1 // pred_check
      _
    $region31: #{tpu_custom_call.1} parent=1 // pred_check_branch
      %60 = sbr.rel (0) target = $region33
    $region32: #{tpu_custom_call.1} parent=1 // pred_region
      %61 = dma.done [#allocation6], 1024
    $region33: #{tpu_custom_call.1} parent=1 // pred_fallthru
      _
    %v63 = vld [vmem:[#allocation2] sm:$0xff]
    %v64 = vld [vmem:[#allocation2 + $0x8] sm:$0xff]
    %v65 = vld [vmem:[#allocation2 + $0x10] sm:$0xff]
    %v66 = vld [vmem:[#allocation2 + $0x18] sm:$0xff]
    %v67 = vld [vmem:[#allocation2 + $0x20] sm:$0xff]
    %v68 = vld [vmem:[#allocation2 + $0x28] sm:$0xff]
    %v69 = vld [vmem:[#allocation2 + $0x30] sm:$0xff]
    %v70 = vld [vmem:[#allocation2 + $0x38] sm:$0xff]
    %v71 = vld [vmem:[#allocation2 + $0x40] sm:$0xff]
    %v72 = vld [vmem:[#allocation2 + $0x48] sm:$0xff]
    %v73 = vld [vmem:[#allocation2 + $0x50] sm:$0xff]
    %v74 = vld [vmem:[#allocation2 + $0x58] sm:$0xff]
    %v75 = vld [vmem:[#allocation2 + $0x60] sm:$0xff]
    %v76 = vld [vmem:[#allocation2 + $0x68] sm:$0xff]
    %v77 = vld [vmem:[#allocation2 + $0x70] sm:$0xff]
    %v78 = vld [vmem:[#allocation2 + $0x78] sm:$0xff]
    %v79 = vld [vmem:[#allocation2 + $0x80] sm:$0xff]
    %v80 = vld [vmem:[#allocation2 + $0x88] sm:$0xff]
    %v81 = vld [vmem:[#allocation2 + $0x90] sm:$0xff]
    %v82 = vld [vmem:[#allocation2 + $0x98] sm:$0xff]
    %v83 = vld [vmem:[#allocation2 + $0xa0] sm:$0xff]
    %v84 = vld [vmem:[#allocation2 + $0xa8] sm:$0xff]
    %v85 = vld [vmem:[#allocation2 + $0xb0] sm:$0xff]
    %v86 = vld [vmem:[#allocation2 + $0xb8] sm:$0xff]
    %v87 = vld [vmem:[#allocation2 + $0xc0] sm:$0xff]
    %v88 = vld [vmem:[#allocation2 + $0xc8] sm:$0xff]
    %v89 = vld [vmem:[#allocation2 + $0xd0] sm:$0xff]
    %v90 = vld [vmem:[#allocation2 + $0xd8] sm:$0xff]
    %v91 = vld [vmem:[#allocation2 + $0xe0] sm:$0xff]
    %v92 = vld [vmem:[#allocation2 + $0xe8] sm:$0xff]
    %v93 = vld [vmem:[#allocation2 + $0xf0] sm:$0xff]
    %v94 = vld [vmem:[#allocation2 + $0xf8] sm:$0xff]
    %v95 = vpack.c.bf16 %v64, %v63
    %v96 = vpack.c.bf16 %v66, %v65
    %v97 = vpack.c.bf16 %v68, %v67
    %v98 = vpack.c.bf16 %v70, %v69
    %v99 = vpack.c.bf16 %v72, %v71
    %v100 = vpack.c.bf16 %v74, %v73
    %v101 = vpack.c.bf16 %v76, %v75
    %v102 = vpack.c.bf16 %v78, %v77
    %v103 = vpack.c.bf16 %v80, %v79
    %v104 = vpack.c.bf16 %v82, %v81
    %v105 = vpack.c.bf16 %v84, %v83
    %v106 = vpack.c.bf16 %v86, %v85
    %v107 = vpack.c.bf16 %v88, %v87
    %v108 = vpack.c.bf16 %v90, %v89
    %v109 = vpack.c.bf16 %v92, %v91
    %v110 = vpack.c.bf16 %v94, %v93
    %v112 = vshrl.u32 %v95, 16
    %v114 = vrot.slane %v112, 7
    %v115 = vshll.u32 %v95, 16
    %v117 = vor.u32 %v114, %v115
    %v119 = vshrl.u32 %v96, 16
    %v121 = vrot.slane %v119, 7
    %v122 = vshll.u32 %v96, 16
    %v124 = vor.u32 %v121, %v122
    %v126 = vshrl.u32 %v97, 16
    %v128 = vrot.slane %v126, 7
    %v129 = vshll.u32 %v97, 16
    %v131 = vor.u32 %v128, %v129
    %v133 = vshrl.u32 %v98, 16
    %v135 = vrot.slane %v133, 7
    %v136 = vshll.u32 %v98, 16
    %v138 = vor.u32 %v135, %v136
    %v140 = vshrl.u32 %v99, 16
    %v142 = vrot.slane %v140, 7
    %v143 = vshll.u32 %v99, 16
    %v145 = vor.u32 %v142, %v143
    %v147 = vshrl.u32 %v100, 16
    %v149 = vrot.slane %v147, 7
    %v150 = vshll.u32 %v100, 16
    %v152 = vor.u32 %v149, %v150
    %v154 = vshrl.u32 %v101, 16
    %v156 = vrot.slane %v154, 7
    %v157 = vshll.u32 %v101, 16
    %v159 = vor.u32 %v156, %v157
    %v161 = vshrl.u32 %v102, 16
    %v163 = vrot.slane %v161, 7
    %v164 = vshll.u32 %v102, 16
    %v166 = vor.u32 %v163, %v164
    %v168 = vshrl.u32 %v103, 16
    %v170 = vrot.slane %v168, 7
    %v171 = vshll.u32 %v103, 16
    %v173 = vor.u32 %v170, %v171
    %v175 = vshrl.u32 %v104, 16
    %v177 = vrot.slane %v175, 7
    %v178 = vshll.u32 %v104, 16
    %v180 = vor.u32 %v177, %v178
    %v182 = vshrl.u32 %v105, 16
    %v184 = vrot.slane %v182, 7
    %v185 = vshll.u32 %v105, 16
    %v187 = vor.u32 %v184, %v185
    %v189 = vshrl.u32 %v106, 16
    %v191 = vrot.slane %v189, 7
    %v192 = vshll.u32 %v106, 16
    %v194 = vor.u32 %v191, %v192
    %v196 = vshrl.u32 %v107, 16
    %v198 = vrot.slane %v196, 7
    %v199 = vshll.u32 %v107, 16
    %v201 = vor.u32 %v198, %v199
    %v203 = vshrl.u32 %v108, 16
    %v205 = vrot.slane %v203, 7
    %v206 = vshll.u32 %v108, 16
    %v208 = vor.u32 %v205, %v206
    %v210 = vshrl.u32 %v109, 16
    %v212 = vrot.slane %v210, 7
    %v213 = vshll.u32 %v109, 16
    %v215 = vor.u32 %v212, %v213
    %v217 = vshrl.u32 %v110, 16
    %v219 = vrot.slane %v217, 7
    %v220 = vshll.u32 %v110, 16
    %v222 = vor.u32 %v219, %v220
    %vm239 = vcmask 1040384
    %vm240 = vsmask.f32 256
    %vm241 = vmand %vm239, %vm240
    %v242 = vsel %vm241, 0, %v117
    %v243 = vsel %vm241, 0, %v124
    %v244 = vsel %vm241, 0, %v131
    %v245 = vsel %vm241, 0, %v138
    %v246 = vsel %vm241, 0, %v145
    %v247 = vsel %vm241, 0, %v152
    %v248 = vsel %vm241, 0, %v159
    %v249 = vsel %vm241, 0, %v166
    %v250 = vsel %vm241, 0, %v173
    %v251 = vsel %vm241, 0, %v180
    %v252 = vsel %vm241, 0, %v187
    %v253 = vsel %vm241, 0, %v194
    %v254 = vsel %vm241, 0, %v201
    %v255 = vsel %vm241, 0, %v208
    %v256 = vsel %vm241, 0, %v215
    %v257 = vsel %vm241, 0, %v222
    %v258 = vrot.slane %v115, 1
    %v259 = vor.u32 %v112, %v258
    %v260 = vrot.slane %v122, 1
    %v261 = vor.u32 %v119, %v260
    %v262 = vrot.slane %v129, 1
    %v263 = vor.u32 %v126, %v262
    %v264 = vrot.slane %v136, 1
    %v265 = vor.u32 %v133, %v264
    %v266 = vrot.slane %v143, 1
    %v267 = vor.u32 %v140, %v266
    %v268 = vrot.slane %v150, 1
    %v269 = vor.u32 %v147, %v268
    %v270 = vrot.slane %v157, 1
    %v271 = vor.u32 %v154, %v270
    %v272 = vrot.slane %v164, 1
    %v273 = vor.u32 %v161, %v272
    %v274 = vrot.slane %v171, 1
    %v275 = vor.u32 %v168, %v274
    %v276 = vrot.slane %v178, 1
    %v277 = vor.u32 %v175, %v276
    %v278 = vrot.slane %v185, 1
    %v279 = vor.u32 %v182, %v278
    %v280 = vrot.slane %v192, 1
    %v281 = vor.u32 %v189, %v280
    %v282 = vrot.slane %v199, 1
    %v283 = vor.u32 %v196, %v282
    %v284 = vrot.slane %v206, 1
    %v285 = vor.u32 %v203, %v284
    %v286 = vrot.slane %v213, 1
    %v287 = vor.u32 %v210, %v286
    %v288 = vrot.slane %v220, 1
    %v289 = vor.u32 %v217, %v288
    %vm306 = vcmask 1047552
    %vm307 = vsmask.f32 7424
    %vm308 = vmand %vm306, %vm307
    %v309 = vsel %vm308, %v259, 0
    %v310 = vsel %vm308, %v261, 0
    %v311 = vsel %vm308, %v263, 0
    %v312 = vsel %vm308, %v265, 0
    %v313 = vsel %vm308, %v267, 0
    %v314 = vsel %vm308, %v269, 0
    %v315 = vsel %vm308, %v271, 0
    %v316 = vsel %vm308, %v273, 0
    %v317 = vsel %vm308, %v275, 0
    %v318 = vsel %vm308, %v277, 0
    %v319 = vsel %vm308, %v279, 0
    %v320 = vsel %vm308, %v281, 0
    %v321 = vsel %vm308, %v283, 0
    %v322 = vsel %vm308, %v285, 0
    %v323 = vsel %vm308, %v287, 0
    %v324 = vsel %vm308, %v289, 0
    %341 = vrot.lane.b32.xlu0 %v95, 32
    %v342 = vpop.permute.xlu0 %341
    %343 = vrot.lane.b32.xlu0 %v96, 32
    %v344 = vpop.permute.xlu0 %343
    %345 = vrot.lane.b32.xlu0 %v97, 32
    %v346 = vpop.permute.xlu0 %345
    %347 = vrot.lane.b32.xlu0 %v98, 32
    %v348 = vpop.permute.xlu0 %347
    %349 = vrot.lane.b32.xlu0 %v99, 32
    %v350 = vpop.permute.xlu0 %349
    %351 = vrot.lane.b32.xlu0 %v100, 32
    %v352 = vpop.permute.xlu0 %351
    %353 = vrot.lane.b32.xlu0 %v101, 32
    %v354 = vpop.permute.xlu0 %353
    %355 = vrot.lane.b32.xlu0 %v102, 32
    %v356 = vpop.permute.xlu0 %355
    %357 = vrot.lane.b32.xlu0 %v103, 32
    %v358 = vpop.permute.xlu0 %357
    %359 = vrot.lane.b32.xlu0 %v104, 32
    %v360 = vpop.permute.xlu0 %359
    %361 = vrot.lane.b32.xlu0 %v105, 32
    %v362 = vpop.permute.xlu0 %361
    %363 = vrot.lane.b32.xlu0 %v106, 32
    %v364 = vpop.permute.xlu0 %363
    %365 = vrot.lane.b32.xlu0 %v107, 32
    %v366 = vpop.permute.xlu0 %365
    %367 = vrot.lane.b32.xlu0 %v108, 32
    %v368 = vpop.permute.xlu0 %367
    %369 = vrot.lane.b32.xlu0 %v109, 32
    %v370 = vpop.permute.xlu0 %369
    %371 = vrot.lane.b32.xlu0 %v110, 32
    %v372 = vpop.permute.xlu0 %371
    %389 = vrot.lane.b32.xlu0 %v309, 64
    %v390 = vpop.permute.xlu0 %389
    %391 = vrot.lane.b32.xlu0 %v310, 64
    %v392 = vpop.permute.xlu0 %391
    %393 = vrot.lane.b32.xlu0 %v311, 64
    %v394 = vpop.permute.xlu0 %393
    %395 = vrot.lane.b32.xlu0 %v312, 64
    %v396 = vpop.permute.xlu0 %395
    %397 = vrot.lane.b32.xlu0 %v313, 64
    %v398 = vpop.permute.xlu0 %397
    %399 = vrot.lane.b32.xlu0 %v314, 64
    %v400 = vpop.permute.xlu0 %399
    %401 = vrot.lane.b32.xlu0 %v315, 64
    %v402 = vpop.permute.xlu0 %401
    %403 = vrot.lane.b32.xlu0 %v316, 64
    %v404 = vpop.permute.xlu0 %403
    %405 = vrot.lane.b32.xlu0 %v317, 64
    %v406 = vpop.permute.xlu0 %405
    %407 = vrot.lane.b32.xlu0 %v318, 64
    %v408 = vpop.permute.xlu0 %407
    %409 = vrot.lane.b32.xlu0 %v319, 64
    %v410 = vpop.permute.xlu0 %409
    %411 = vrot.lane.b32.xlu0 %v320, 64
    %v412 = vpop.permute.xlu0 %411
    %413 = vrot.lane.b32.xlu0 %v321, 64
    %v414 = vpop.permute.xlu0 %413
    %415 = vrot.lane.b32.xlu0 %v322, 64
    %v416 = vpop.permute.xlu0 %415
    %417 = vrot.lane.b32.xlu0 %v323, 64
    %v418 = vpop.permute.xlu0 %417
    %419 = vrot.lane.b32.xlu0 %v324, 64
    %v420 = vpop.permute.xlu0 %419
    %vm421 = vcmask 261120
    %v424 = vsel %vm421, %v242, %v342
    %v427 = vsel %vm421, %v243, %v344
    %v430 = vsel %vm421, %v244, %v346
    %v433 = vsel %vm421, %v245, %v348
    %v436 = vsel %vm421, %v246, %v350
    %v439 = vsel %vm421, %v247, %v352
    %v442 = vsel %vm421, %v248, %v354
    %v445 = vsel %vm421, %v249, %v356
    %v448 = vsel %vm421, %v250, %v358
    %v451 = vsel %vm421, %v251, %v360
    %v454 = vsel %vm421, %v252, %v362
    %v457 = vsel %vm421, %v253, %v364
    %v460 = vsel %vm421, %v254, %v366
    %v463 = vsel %vm421, %v255, %v368
    %v466 = vsel %vm421, %v256, %v370
    %v469 = vsel %vm421, %v257, %v372
    %vm470 = vcmask 523264
    %v472 = vsel %vm470, %v424, %v390
    %v474 = vsel %vm470, %v427, %v392
    %v476 = vsel %vm470, %v430, %v394
    %v478 = vsel %vm470, %v433, %v396
    %v480 = vsel %vm470, %v436, %v398
    %v482 = vsel %vm470, %v439, %v400
    %v484 = vsel %vm470, %v442, %v402
    %v486 = vsel %vm470, %v445, %v404
    %v488 = vsel %vm470, %v448, %v406
    %v490 = vsel %vm470, %v451, %v408
    %v492 = vsel %vm470, %v454, %v410
    %v494 = vsel %vm470, %v457, %v412
    %v496 = vsel %vm470, %v460, %v414
    %v498 = vsel %vm470, %v463, %v416
    %v500 = vsel %vm470, %v466, %v418
    %v502 = vsel %vm470, %v469, %v420
    %v503 = vld [vmem:[#allocation5] sm:$0xf]
    %v504 = vld [vmem:[#allocation5 + $0x4] sm:$0xf]
    %v505 = vld [vmem:[#allocation5 + $0x8] sm:$0xf]
    %v506 = vld [vmem:[#allocation5 + $0xc] sm:$0xf]
    %v507 = vld [vmem:[#allocation5 + $0x10] sm:$0xf]
    %v508 = vld [vmem:[#allocation5 + $0x14] sm:$0xf]
    %v509 = vld [vmem:[#allocation5 + $0x18] sm:$0xf]
    %v510 = vld [vmem:[#allocation5 + $0x1c] sm:$0xf]
    %v511 = vld [vmem:[#allocation5 + $0x20] sm:$0xf]
    %v512 = vld [vmem:[#allocation5 + $0x24] sm:$0xf]
    %v513 = vld [vmem:[#allocation5 + $0x28] sm:$0xf]
    %v514 = vld [vmem:[#allocation5 + $0x2c] sm:$0xf]
    %v515 = vld [vmem:[%s2] sm:$0x1]
    %v517 = vlaneseq
    %v518 = vshrl.u32 %v517, 7
    %v519 = vsub.s32 0, %v518
    %v520 = vrot.slane %v515, %v519
    %v534 = vunpack.c.l.b16 %v503
    %v535 = vunpack.c.l.b16 %v504
    %v536 = vunpack.c.l.b16 %v505
    %v537 = vunpack.c.l.b16 %v506
    %v538 = vunpack.c.l.b16 %v507
    %v539 = vunpack.c.l.b16 %v508
    %v540 = vunpack.c.l.b16 %v509
    %v541 = vunpack.c.l.b16 %v510
    %v542 = vunpack.c.l.b16 %v511
    %v543 = vunpack.c.l.b16 %v512
    %v544 = vunpack.c.l.b16 %v513
    %v545 = vunpack.c.l.b16 %v514
    %v546 = vpack.c.b16 %v535, %v534
    %v547 = vpack.c.b16 %v537, %v536
    %v548 = vpack.c.b16 %v539, %v538
    %v549 = vpack.c.b16 %v541, %v540
    %v550 = vpack.c.b16 %v543, %v542
    %v551 = vpack.c.b16 %v545, %v544
    %vm558 = vcmask 785408
    %v559 = vsel %vm558, %v472, 0
    %v561 = vsel %vm558, %v474, 0
    %v563 = vsel %vm558, %v476, 0
    %v565 = vsel %vm558, %v478, 0
    %v567 = vsel %vm558, %v480, 0
    %v569 = vsel %vm558, %v482, 0
    %v571 = vsel %vm558, %v484, 0
    %v573 = vsel %vm558, %v486, 0
    %v575 = vsel %vm558, %v488, 0
    %v577 = vsel %vm558, %v490, 0
    %v579 = vsel %vm558, %v492, 0
    %v581 = vsel %vm558, %v494, 0
    %v583 = vsel %vm558, %v496, 0
    %v585 = vsel %vm558, %v498, 0
    %v587 = vsel %vm558, %v500, 0
    %v589 = vsel %vm558, %v502, 0
    %591 = vmatprep.subr.bf16.mxu0 0
    %592 = vmatpush1.bf16.msra.mxu0 %v546
    %593 = vmatprep.subr.bf16.mxu0 0
    %594 = vmatpush1.bf16.msra.mxu0 %v547
    %595 = vmatprep.subr.bf16.mxu0 0
    %596 = vmatpush1.bf16.msra.mxu0 %v548
    %597 = vmatprep.subr.bf16.mxu0 0
    %598 = vmatpush1.bf16.msra.mxu0 %v549
    %599 = vmatprep.subr.bf16.mxu0 0
    %600 = vmatpush1.bf16.msra.mxu0 %v550
    %601 = vmatprep.subr.bf16.mxu0 0
    %602 = vmatpush1.bf16.msra.mxu0 %v551
    %603 = vmatprep.subr.bf16.mxu0 0
    %604 = vmatpush1.bf16.msra.mxu0 0
    %605 = vmatprep.subr.bf16.mxu0 0
    %606 = vmatpush1.bf16.msra.mxu0 0
    %607 = vmatprep.subr.bf16.mxu0 0
    %608 = vmatpush1.bf16.msra.mxu0 0
    %609 = vmatprep.subr.bf16.mxu0 0
    %610 = vmatpush1.bf16.msra.mxu0 0
    %611 = vmatprep.subr.bf16.mxu0 0
    %612 = vmatpush1.bf16.msra.mxu0 0
    %613 = vmatprep.subr.bf16.mxu0 0
    %614 = vmatpush1.bf16.msra.mxu0 0
    %615 = vmatprep.subr.bf16.mxu0 0
    %616 = vmatpush1.bf16.msra.mxu0 0
    %617 = vmatprep.subr.bf16.mxu0 0
    %618 = vmatpush1.bf16.msra.mxu0 0
    %619 = vmatprep.subr.bf16.mxu0 0
    %620 = vmatpush1.bf16.msra.mxu0 0
    %621 = vmatprep.subr.bf16.mxu0 0
    %622 = vmatpush1.bf16.msra.mxu0 0
    %623 = vmatprep.mubr.bf16.mxu0 0
    %624 = vmatmul.mubr.bf16.gmra.mrb[0].mxu0 %v559
    %v625 = vpop.f32.mrb[0].mxu0
    %v626 = vadd.f32 %v520, %v625
    %v627 = vpop.f32.mrb[0].mxu0
    %v628 = vpop.f32.mrb[0].mxu0
    %v629 = vadd.f32 %v520, %v628
    %v630 = vpop.f32.mrb[0].mxu0
    %631 = vmatprep.mubr.bf16.mxu0 0
    %632 = vmatmul.mubr.bf16.gmra.mrb[0].mxu0 %v561
    %v633 = vpop.f32.mrb[0].mxu0
    %v634 = vadd.f32 %v520, %v633
    %v635 = vpop.f32.mrb[0].mxu0
    %v636 = vpop.f32.mrb[0].mxu0
    %v637 = vadd.f32 %v520, %v636
    %v638 = vpop.f32.mrb[0].mxu0
    %639 = vmatprep.mubr.bf16.mxu0 0
    %640 = vmatmul.mubr.bf16.gmra.mrb[0].mxu0 %v563
    %v641 = vpop.f32.mrb[0].mxu0
    %v642 = vadd.f32 %v520, %v641
    %v643 = vpop.f32.mrb[0].mxu0
    %v644 = vpop.f32.mrb[0].mxu0
    %v645 = vadd.f32 %v520, %v644
    %v646 = vpop.f32.mrb[0].mxu0
    %647 = vmatprep.mubr.bf16.mxu0 0
    %648 = vmatmul.mubr.bf16.gmra.mrb[0].mxu0 %v565
    %v649 = vpop.f32.mrb[0].mxu0
    %v650 = vadd.f32 %v520, %v649
    %v651 = vpop.f32.mrb[0].mxu0
    %v652 = vpop.f32.mrb[0].mxu0
    %v653 = vadd.f32 %v520, %v652
    %v654 = vpop.f32.mrb[0].mxu0
    %655 = vmatprep.mubr.bf16.mxu0 0
    %656 = vmatmul.mubr.bf16.gmra.mrb[0].mxu0 %v567
    %v657 = vpop.f32.mrb[0].mxu0
    %v658 = vadd.f32 %v520, %v657
    %v659 = vpop.f32.mrb[0].mxu0
    %v660 = vpop.f32.mrb[0].mxu0
    %v661 = vadd.f32 %v520, %v660
    %v662 = vpop.f32.mrb[0].mxu0
    %663 = vmatprep.mubr.bf16.mxu0 0
    %664 = vmatmul.mubr.bf16.gmra.mrb[0].mxu0 %v569
    %v665 = vpop.f32.mrb[0].mxu0
    %v666 = vadd.f32 %v520, %v665
    %v667 = vpop.f32.mrb[0].mxu0
    %v668 = vpop.f32.mrb[0].mxu0
    %v669 = vadd.f32 %v520, %v668
    %v670 = vpop.f32.mrb[0].mxu0
    %671 = vmatprep.mubr.bf16.mxu0 0
    %672 = vmatmul.mubr.bf16.gmra.mrb[0].mxu0 %v571
    %v673 = vpop.f32.mrb[0].mxu0
    %v674 = vadd.f32 %v520, %v673
    %v675 = vpop.f32.mrb[0].mxu0
    %v676 = vpop.f32.mrb[0].mxu0
    %v677 = vadd.f32 %v520, %v676
    %v678 = vpop.f32.mrb[0].mxu0
    %679 = vmatprep.mubr.bf16.mxu0 0
    %680 = vmatmul.mubr.bf16.gmra.mrb[0].mxu0 %v573
    %v681 = vpop.f32.mrb[0].mxu0
    %v682 = vadd.f32 %v520, %v681
    %v683 = vpop.f32.mrb[0].mxu0
    %v684 = vpop.f32.mrb[0].mxu0
    %v685 = vadd.f32 %v520, %v684
    %v686 = vpop.f32.mrb[0].mxu0
    %687 = vmatprep.mubr.bf16.mxu0 0
    %688 = vmatmul.mubr.bf16.gmra.mrb[0].mxu0 %v575
    %v689 = vpop.f32.mrb[0].mxu0
    %v690 = vadd.f32 %v520, %v689
    %v691 = vpop.f32.mrb[0].mxu0
    %v692 = vpop.f32.mrb[0].mxu0
    %v693 = vadd.f32 %v520, %v692
    %v694 = vpop.f32.mrb[0].mxu0
    %695 = vmatprep.mubr.bf16.mxu0 0
    %696 = vmatmul.mubr.bf16.gmra.mrb[0].mxu0 %v577
    %v697 = vpop.f32.mrb[0].mxu0
    %v698 = vadd.f32 %v520, %v697
    %v699 = vpop.f32.mrb[0].mxu0
    %v700 = vpop.f32.mrb[0].mxu0
    %v701 = vadd.f32 %v520, %v700
    %v702 = vpop.f32.mrb[0].mxu0
    %703 = vmatprep.mubr.bf16.mxu0 0
    %704 = vmatmul.mubr.bf16.gmra.mrb[0].mxu0 %v579
    %v705 = vpop.f32.mrb[0].mxu0
    %v706 = vadd.f32 %v520, %v705
    %v707 = vpop.f32.mrb[0].mxu0
    %v708 = vpop.f32.mrb[0].mxu0
    %v709 = vadd.f32 %v520, %v708
    %v710 = vpop.f32.mrb[0].mxu0
    %711 = vmatprep.mubr.bf16.mxu0 0
    %712 = vmatmul.mubr.bf16.gmra.mrb[0].mxu0 %v581
    %v713 = vpop.f32.mrb[0].mxu0
    %v714 = vadd.f32 %v520, %v713
    %v715 = vpop.f32.mrb[0].mxu0
    %v716 = vpop.f32.mrb[0].mxu0
    %v717 = vadd.f32 %v520, %v716
    %v718 = vpop.f32.mrb[0].mxu0
    %719 = vmatprep.mubr.bf16.mxu0 0
    %720 = vmatmul.mubr.bf16.gmra.mrb[0].mxu0 %v583
    %v721 = vpop.f32.mrb[0].mxu0
    %v722 = vadd.f32 %v520, %v721
    %v723 = vpop.f32.mrb[0].mxu0
    %v724 = vpop.f32.mrb[0].mxu0
    %v725 = vadd.f32 %v520, %v724
    %v726 = vpop.f32.mrb[0].mxu0
    %727 = vmatprep.mubr.bf16.mxu0 0
    %728 = vmatmul.mubr.bf16.gmra.mrb[0].mxu0 %v585
    %v729 = vpop.f32.mrb[0].mxu0
    %v730 = vadd.f32 %v520, %v729
    %v731 = vpop.f32.mrb[0].mxu0
    %v732 = vpop.f32.mrb[0].mxu0
    %v733 = vadd.f32 %v520, %v732
    %v734 = vpop.f32.mrb[0].mxu0
    %735 = vmatprep.mubr.bf16.mxu0 0
    %736 = vmatmul.mubr.bf16.gmra.mrb[0].mxu0 %v587
    %v737 = vpop.f32.mrb[0].mxu0
    %v738 = vadd.f32 %v520, %v737
    %v739 = vpop.f32.mrb[0].mxu0
    %v740 = vpop.f32.mrb[0].mxu0
    %v741 = vadd.f32 %v520, %v740
    %v742 = vpop.f32.mrb[0].mxu0
    %743 = vmatprep.mubr.bf16.mxu0 0
    %744 = vmatmul.mubr.bf16.gmra.mrb[0].mxu0 %v589
    %v745 = vpop.f32.mrb[0].mxu0
    %v746 = vadd.f32 %v520, %v745
    %v747 = vpop.f32.mrb[0].mxu0
    %v748 = vpop.f32.mrb[0].mxu0
    %v749 = vadd.f32 %v520, %v748
    %v750 = vpop.f32.mrb[0].mxu0
    %751 = vdwg.mxu0
    %v752 = vmax.f32 %v626, 0.0
    %v753 = vmax.f32 %v629, 0.0
    %v754 = vmax.f32 %v634, 0.0
    %v755 = vmax.f32 %v637, 0.0
    %v756 = vmax.f32 %v642, 0.0
    %v757 = vmax.f32 %v645, 0.0
    %v758 = vmax.f32 %v650, 0.0
    %v759 = vmax.f32 %v653, 0.0
    %v760 = vmax.f32 %v658, 0.0
    %v761 = vmax.f32 %v661, 0.0
    %v762 = vmax.f32 %v666, 0.0
    %v763 = vmax.f32 %v669, 0.0
    %v764 = vmax.f32 %v674, 0.0
    %v765 = vmax.f32 %v677, 0.0
    %v766 = vmax.f32 %v682, 0.0
    %v767 = vmax.f32 %v685, 0.0
    %v768 = vmax.f32 %v690, 0.0
    %v769 = vmax.f32 %v693, 0.0
    %v770 = vmax.f32 %v698, 0.0
    %v771 = vmax.f32 %v701, 0.0
    %v772 = vmax.f32 %v706, 0.0
    %v773 = vmax.f32 %v709, 0.0
    %v774 = vmax.f32 %v714, 0.0
    %v775 = vmax.f32 %v717, 0.0
    %v776 = vmax.f32 %v722, 0.0
    %v777 = vmax.f32 %v725, 0.0
    %v778 = vmax.f32 %v730, 0.0
    %v779 = vmax.f32 %v733, 0.0
    %v780 = vmax.f32 %v738, 0.0
    %v781 = vmax.f32 %v741, 0.0
    %v782 = vmax.f32 %v746, 0.0
    %v783 = vmax.f32 %v749, 0.0
    %v784 = vmax.f32 %v752, %v753
    %v785 = vrot.slane %v784, 4
    %v786 = vmax.f32 %v784, %v785
    %v787 = vrot.slane %v786, 2
    %v788 = vmax.f32 %v786, %v787
    %v789 = vrot.slane %v788, 1
    %v790 = vmax.f32 %v788, %v789
    %v791 = vmax.f32 %v754, %v755
    %v792 = vrot.slane %v791, 4
    %v793 = vmax.f32 %v791, %v792
    %v794 = vrot.slane %v793, 2
    %v795 = vmax.f32 %v793, %v794
    %v796 = vrot.slane %v795, 1
    %v797 = vmax.f32 %v795, %v796
    %v798 = vmax.f32 %v756, %v757
    %v799 = vrot.slane %v798, 4
    %v800 = vmax.f32 %v798, %v799
    %v801 = vrot.slane %v800, 2
    %v802 = vmax.f32 %v800, %v801
    %v803 = vrot.slane %v802, 1
    %v804 = vmax.f32 %v802, %v803
    %v805 = vmax.f32 %v758, %v759
    %v806 = vrot.slane %v805, 4
    %v807 = vmax.f32 %v805, %v806
    %v808 = vrot.slane %v807, 2
    %v809 = vmax.f32 %v807, %v808
    %v810 = vrot.slane %v809, 1
    %v811 = vmax.f32 %v809, %v810
    %v812 = vmax.f32 %v760, %v761
    %v813 = vrot.slane %v812, 4
    %v814 = vmax.f32 %v812, %v813
    %v815 = vrot.slane %v814, 2
    %v816 = vmax.f32 %v814, %v815
    %v817 = vrot.slane %v816, 1
    %v818 = vmax.f32 %v816, %v817
    %v819 = vmax.f32 %v762, %v763
    %v820 = vrot.slane %v819, 4
    %v821 = vmax.f32 %v819, %v820
    %v822 = vrot.slane %v821, 2
    %v823 = vmax.f32 %v821, %v822
    %v824 = vrot.slane %v823, 1
    %v825 = vmax.f32 %v823, %v824
    %v826 = vmax.f32 %v764, %v765
    %v827 = vrot.slane %v826, 4
    %v828 = vmax.f32 %v826, %v827
    %v829 = vrot.slane %v828, 2
    %v830 = vmax.f32 %v828, %v829
    %v831 = vrot.slane %v830, 1
    %v832 = vmax.f32 %v830, %v831
    %v833 = vmax.f32 %v766, %v767
    %v834 = vrot.slane %v833, 4
    %v835 = vmax.f32 %v833, %v834
    %v836 = vrot.slane %v835, 2
    %v837 = vmax.f32 %v835, %v836
    %v838 = vrot.slane %v837, 1
    %v839 = vmax.f32 %v837, %v838
    %v840 = vmax.f32 %v768, %v769
    %v841 = vrot.slane %v840, 4
    %v842 = vmax.f32 %v840, %v841
    %v843 = vrot.slane %v842, 2
    %v844 = vmax.f32 %v842, %v843
    %v845 = vrot.slane %v844, 1
    %v846 = vmax.f32 %v844, %v845
    %v847 = vmax.f32 %v770, %v771
    %v848 = vrot.slane %v847, 4
    %v849 = vmax.f32 %v847, %v848
    %v850 = vrot.slane %v849, 2
    %v851 = vmax.f32 %v849, %v850
    %v852 = vrot.slane %v851, 1
    %v853 = vmax.f32 %v851, %v852
    %v854 = vmax.f32 %v772, %v773
    %v855 = vrot.slane %v854, 4
    %v856 = vmax.f32 %v854, %v855
    %v857 = vrot.slane %v856, 2
    %v858 = vmax.f32 %v856, %v857
    %v859 = vrot.slane %v858, 1
    %v860 = vmax.f32 %v858, %v859
    %v861 = vmax.f32 %v774, %v775
    %v862 = vrot.slane %v861, 4
    %v863 = vmax.f32 %v861, %v862
    %v864 = vrot.slane %v863, 2
    %v865 = vmax.f32 %v863, %v864
    %v866 = vrot.slane %v865, 1
    %v867 = vmax.f32 %v865, %v866
    %v868 = vmax.f32 %v776, %v777
    %v869 = vrot.slane %v868, 4
    %v870 = vmax.f32 %v868, %v869
    %v871 = vrot.slane %v870, 2
    %v872 = vmax.f32 %v870, %v871
    %v873 = vrot.slane %v872, 1
    %v874 = vmax.f32 %v872, %v873
    %v875 = vmax.f32 %v778, %v779
    %v876 = vrot.slane %v875, 4
    %v877 = vmax.f32 %v875, %v876
    %v878 = vrot.slane %v877, 2
    %v879 = vmax.f32 %v877, %v878
    %v880 = vrot.slane %v879, 1
    %v881 = vmax.f32 %v879, %v880
    %v882 = vmax.f32 %v780, %v781
    %v883 = vrot.slane %v882, 4
    %v884 = vmax.f32 %v882, %v883
    %v885 = vrot.slane %v884, 2
    %v886 = vmax.f32 %v884, %v885
    %v887 = vrot.slane %v886, 1
    %v888 = vmax.f32 %v886, %v887
    %v889 = vmax.f32 %v782, %v783
    %v890 = vrot.slane %v889, 4
    %v891 = vmax.f32 %v889, %v890
    %v892 = vrot.slane %v891, 2
    %v893 = vmax.f32 %v891, %v892
    %v894 = vrot.slane %v893, 1
    %v895 = vmax.f32 %v893, %v894
    %v896 = vpack.c.bf16 %v790, %v790
    %v897 = vpack.c.bf16 %v797, %v797
    %v898 = vpack.c.bf16 %v804, %v804
    %v899 = vpack.c.bf16 %v811, %v811
    %v900 = vpack.c.bf16 %v818, %v818
    %v901 = vpack.c.bf16 %v825, %v825
    %v902 = vpack.c.bf16 %v832, %v832
    %v903 = vpack.c.bf16 %v839, %v839
    %v904 = vpack.c.bf16 %v846, %v846
    %v905 = vpack.c.bf16 %v853, %v853
    %v906 = vpack.c.bf16 %v860, %v860
    %v907 = vpack.c.bf16 %v867, %v867
    %v908 = vpack.c.bf16 %v874, %v874
    %v909 = vpack.c.bf16 %v881, %v881
    %v910 = vpack.c.bf16 %v888, %v888
    %v911 = vpack.c.bf16 %v895, %v895
    %v912 = vld [vmem:[#allocation7] sm:$0xf]
    %v913 = vld [vmem:[#allocation7 + $0x4] sm:$0xf]
    %v914 = vld [vmem:[#allocation7 + $0x8] sm:$0xf]
    %v915 = vld [vmem:[#allocation7 + $0xc] sm:$0xf]
    %v916 = vld [vmem:[#allocation7 + $0x10] sm:$0xf]
    %v917 = vld [vmem:[#allocation7 + $0x14] sm:$0xf]
    %v918 = vld [vmem:[#allocation7 + $0x18] sm:$0xf]
    %v919 = vld [vmem:[#allocation7 + $0x1c] sm:$0xf]
    %v920 = vld [vmem:[#allocation7 + $0x20] sm:$0xf]
    %v921 = vld [vmem:[#allocation7 + $0x24] sm:$0xf]
    %v922 = vld [vmem:[#allocation7 + $0x28] sm:$0xf]
    %v923 = vld [vmem:[#allocation7 + $0x2c] sm:$0xf]
    %v924 = vld [vmem:[#allocation7 + $0x30] sm:$0xf]
    %v925 = vld [vmem:[#allocation7 + $0x34] sm:$0xf]
    %v926 = vld [vmem:[#allocation7 + $0x38] sm:$0xf]
    %v927 = vld [vmem:[#allocation7 + $0x3c] sm:$0xf]
    %v928 = vld [vmem:[%s4] sm:$0x1]
    %v930 = vlaneseq
    %v931 = vshrl.u32 %v930, 7
    %v932 = vsub.s32 0, %v931
    %v933 = vrot.slane %v928, %v932
    %v951 = vunpack.c.l.b16 %v896
    %v952 = vunpack.c.l.b16 %v897
    %v953 = vunpack.c.l.b16 %v898
    %v954 = vunpack.c.l.b16 %v899
    %v955 = vunpack.c.l.b16 %v900
    %v956 = vunpack.c.l.b16 %v901
    %v957 = vunpack.c.l.b16 %v902
    %v958 = vunpack.c.l.b16 %v903
    %v959 = vunpack.c.l.b16 %v904
    %v960 = vunpack.c.l.b16 %v905
    %v961 = vunpack.c.l.b16 %v906
    %v962 = vunpack.c.l.b16 %v907
    %v963 = vunpack.c.l.b16 %v908
    %v964 = vunpack.c.l.b16 %v909
    %v965 = vunpack.c.l.b16 %v910
    %v966 = vunpack.c.l.b16 %v911
    %vm967 = vcmask 1041409
    %v968 = vsel %vm967, %v952, %v951
    %vm969 = vcmask 1042434
    %v970 = vsel %vm969, %v953, %v968
    %vm971 = vcmask 1043459
    %v972 = vsel %vm971, %v954, %v970
    %vm973 = vcmask 1044484
    %v974 = vsel %vm973, %v955, %v972
    %vm975 = vcmask 1045509
    %v976 = vsel %vm975, %v956, %v974
    %vm977 = vcmask 1046534
    %v978 = vsel %vm977, %v957, %v976
    %vm979 = vcmask 1047559
    %v980 = vsel %vm979, %v958, %v978
    %v981 = vsel %vm967, %v960, %v959
    %v982 = vsel %vm969, %v961, %v981
    %v983 = vsel %vm971, %v962, %v982
    %v984 = vsel %vm973, %v963, %v983
    %v985 = vsel %vm975, %v964, %v984
    %v986 = vsel %vm977, %v965, %v985
    %v987 = vsel %vm979, %v966, %v986
    %v988 = vpack.c.b16 %v987, %v980
    %v1006 = vunpack.c.l.b16 %v912
    %v1007 = vunpack.c.l.b16 %v913
    %v1008 = vunpack.c.l.b16 %v914
    %v1009 = vunpack.c.l.b16 %v915
    %v1010 = vunpack.c.l.b16 %v916
    %v1011 = vunpack.c.l.b16 %v917
    %v1012 = vunpack.c.l.b16 %v918
    %v1013 = vunpack.c.l.b16 %v919
    %v1014 = vunpack.c.l.b16 %v920
    %v1015 = vunpack.c.l.b16 %v921
    %v1016 = vunpack.c.l.b16 %v922
    %v1017 = vunpack.c.l.b16 %v923
    %v1018 = vunpack.c.l.b16 %v924
    %v1019 = vunpack.c.l.b16 %v925
    %v1020 = vunpack.c.l.b16 %v926
    %v1021 = vunpack.c.l.b16 %v927
    %v1022 = vpack.c.b16 %v1007, %v1006
    %v1023 = vpack.c.b16 %v1009, %v1008
    %v1024 = vpack.c.b16 %v1011, %v1010
    %v1025 = vpack.c.b16 %v1013, %v1012
    %v1026 = vpack.c.b16 %v1015, %v1014
    %v1027 = vpack.c.b16 %v1017, %v1016
    %v1028 = vpack.c.b16 %v1019, %v1018
    %v1029 = vpack.c.b16 %v1021, %v1020
    %1038 = vmatprep.subr.bf16.mxu0 0
    %1039 = vmatpush1.bf16.msra.mxu0 %v1022
    %1040 = vmatprep.subr.bf16.mxu0 0
    %1041 = vmatpush1.bf16.msra.mxu0 %v1023
    %1042 = vmatprep.subr.bf16.mxu0 0
    %1043 = vmatpush1.bf16.msra.mxu0 %v1024
    %1044 = vmatprep.subr.bf16.mxu0 0
    %1045 = vmatpush1.bf16.msra.mxu0 %v1025
    %1046 = vmatprep.subr.bf16.mxu0 0
    %1047 = vmatpush1.bf16.msra.mxu0 %v1026
    %1048 = vmatprep.subr.bf16.mxu0 0
    %1049 = vmatpush1.bf16.msra.mxu0 %v1027
    %1050 = vmatprep.subr.bf16.mxu0 0
    %1051 = vmatpush1.bf16.msra.mxu0 %v1028
    %1052 = vmatprep.subr.bf16.mxu0 0
    %1053 = vmatpush1.bf16.msra.mxu0 %v1029
    %1054 = vmatprep.subr.bf16.mxu0 0
    %1055 = vmatpush1.bf16.msra.mxu0 0
    %1056 = vmatprep.subr.bf16.mxu0 0
    %1057 = vmatpush1.bf16.msra.mxu0 0
    %1058 = vmatprep.subr.bf16.mxu0 0
    %1059 = vmatpush1.bf16.msra.mxu0 0
    %1060 = vmatprep.subr.bf16.mxu0 0
    %1061 = vmatpush1.bf16.msra.mxu0 0
    %1062 = vmatprep.subr.bf16.mxu0 0
    %1063 = vmatpush1.bf16.msra.mxu0 0
    %1064 = vmatprep.subr.bf16.mxu0 0
    %1065 = vmatpush1.bf16.msra.mxu0 0
    %1066 = vmatprep.subr.bf16.mxu0 0
    %1067 = vmatpush1.bf16.msra.mxu0 0
    %1068 = vmatprep.subr.bf16.mxu0 0
    %1069 = vmatpush1.bf16.msra.mxu0 0
    %1070 = vmatprep.mubr.bf16.mxu0 0
    %1071 = vmatmul.mubr.bf16.gmra.mrb[0].mxu0 %v988
    %v1072 = vpop.f32.mrb[0].mxu0
    %v1073 = vadd.f32 %v933, %v1072
    %v1074 = vpop.f32.mrb[0].mxu0
    %v1075 = vpop.f32.mrb[0].mxu0
    %v1076 = vadd.f32 %v933, %v1075
    %v1077 = vpop.f32.mrb[0].mxu0
    %1078 = vdwg.mxu0
    %v1079 = vmax.f32 %v1073, 0.0
    %v1080 = vmax.f32 %v1076, 0.0
    %1081 = vst [vmem:[#allocation8] sm:$0xff] %v1079
    %1082 = vst [vmem:[#allocation8 + $0x8] sm:$0xff] %v1080
    // Predicated region
    $region34: #{tpu_custom_call.1} parent=1 // pred_check
      _
    $region35: #{tpu_custom_call.1} parent=1 // pred_check_branch
      %1084 = sbr.rel (0) target = $region37
    $region36: #{tpu_custom_call.1} parent=1 // pred_region
      %s1086 = ssub.s32 256, 256
      %1087 = vsyncadd [#allocation4], %s1086
      %s1088 = sshll.u32 [#allocation8], 4
      %s1089 = int_to_ptr.vmem [resolvable:$true] %s1088
      %1094 = dma.vmem_to_hbm [thread:$0]  %s1089, 256, %s5, [#allocation4], 128, 128, 8
    $region37: #{tpu_custom_call.1} parent=1 // pred_fallthru
      _
    // Predicated region
    $region38: #{tpu_custom_call.1} parent=1 // pred_check
      _
    $region39: #{tpu_custom_call.1} parent=1 // pred_check_branch
      %1096 = sbr.rel (0) target = $region41
    $region40: #{tpu_custom_call.1} parent=1 // pred_region
      %1097 = dma.done [#allocation4], 256
    $region41: #{tpu_custom_call.1} parent=1 // pred_fallthru
      _
    %1098 = vsyncpa [#allocation3], 1
    %1099 = vsyncpa [#allocation6], 1
    %1100 = vsyncpa [#allocation4], 1

</llo_original>
